<compile_context>
chip_gen: v7x
topology: tpu7x:2x2x1
jax: 0.10.0
libtpu: 0.0.40
codegen_flags: <defaults>
</compile_context>

<pallas_src>
import functools

import jax
import jax.numpy as jnp
from jax.experimental import pallas as pl
from jax.experimental.pallas import tpu as pltpu

NEG_SLOPE = 0.01   # nn.LeakyReLU default negative_slope
LANE = 128         # vreg lane width
SUBLANE = 8        # f32 sublane count


def _round_up(x, m):
    return (x + m - 1) // m * m


# ----------------------------- Pallas kernel (hot path) ----------------------------- #
def head_kernel(cls_ref, meta_ref, w1c_ref, w1m_ref, b1_ref, w2_ref, o_ref):
    """Fused regression head for one batch tile.

    h = cls @ W1_cls + meta @ W1_meta + b1   (concat eliminated by splitting W1)
    h = LeakyReLU(h); Dropout is identity (eval mode)
    y = sum(h * w2_row, lanes)               (OUT=1 Linear as VPU/XLU reduction;
                                              b2 folded in via the bias lane)
    """
    h = jnp.dot(cls_ref[...], w1c_ref[...], preferred_element_type=jnp.float32)
    h = h + jnp.dot(meta_ref[...], w1m_ref[...], preferred_element_type=jnp.float32)
    h = h + b1_ref[...]                                   # (TILE_B, D_PAD) + (1, D_PAD)
    h = jnp.where(h > 0, h, NEG_SLOPE * h)                # LeakyReLU in f32 on the VPU
    # TODO(synk): nn.Dropout(p=0.1) is identity in eval mode; training-mode dropout
    # (pltpu.prng_seed + pltpu.stateful_bernoulli) intentionally not applied here.
    y = jnp.sum(h * w2_ref[...], axis=-1, keepdims=True)  # (TILE_B, 1); includes b2
    # Lane-dense unmasked store: broadcast the per-row scalar across the 128-lane tile;
    # the wrapper slices out column 0.
    o_ref[...] = jnp.broadcast_to(y, o_ref.shape).astype(o_ref.dtype)


def regressor_head(cls, meta, w1, b1, w2, b2):
    """cls: [B, H] f32, meta: [B, M] f32; w1: (H+M, H+M), b1: (H+M,), w2: (H+M, 1), b2: (1,).

    Returns [B, 1] f32. Implements the OUT=1 path (the module's default outputs=1).
    """
    B, H = cls.shape
    M = meta.shape[1]
    D = H + M
    assert w1.shape == (D, D) and w2.shape == (D, 1) and b1.shape == (D,) and b2.shape == (1,)

    # Reserve at least one spare lane for the b2 "bias lane".
    d_pad = _round_up(D + 1, LANE)
    out_pad = LANE                                  # lane-dense output tile width
    tile_b = min(512, _round_up(B, SUBLANE))        # small demo -> 8; prod batches -> 512
    b_pad = _round_up(B, tile_b)

    # Zero padding is exact: padded hidden lanes give h=0 -> LeakyReLU 0 -> *0 in w2.
    # Bias lane at index D: h[:, D] = 0 + 0 + 1 -> LeakyReLU 1 -> * b2 adds b2 to the sum.
    cls_p = jnp.pad(cls, ((0, b_pad - B), (0, 0)))
    meta_p = jnp.pad(meta, ((0, b_pad - B), (0, 0)))
    w1c = jnp.pad(w1[:H, :], ((0, 0), (0, d_pad - D)))                    # (H, d_pad)
    w1m = jnp.pad(w1[H:, :], ((0, 0), (0, d_pad - D)))                    # (M, d_pad)
    b1p = jnp.pad(b1, (0, d_pad - D)).at[D].set(1.0).reshape(1, d_pad)    # bias lane = 1
    w2r = jnp.pad(w2[:, 0], (0, d_pad - D)).at[D].set(b2[0]).reshape(1, d_pad)

    full_block = lambda i: (0, 0)   # resident weights: same block every grid step
    out = pl.pallas_call(
        head_kernel,
        out_shape=jax.ShapeDtypeStruct((b_pad, out_pad), jnp.float32),
        grid_spec=pltpu.PrefetchScalarGridSpec(
            num_scalar_prefetch=0,
            grid=(b_pad // tile_b,),
            in_specs=[
                pl.BlockSpec((tile_b, H), lambda i: (i, 0)),      # cls rows
                pl.BlockSpec((tile_b, M), lambda i: (i, 0)),      # meta rows
                pl.BlockSpec((H, d_pad), full_block),             # W1[:H]
                pl.BlockSpec((M, d_pad), full_block),             # W1[H:]
                pl.BlockSpec((1, d_pad), full_block),             # b1 (+ bias lane)
                pl.BlockSpec((1, d_pad), full_block),             # w2 row (+ b2 lane)
            ],
            out_specs=pl.BlockSpec((tile_b, out_pad), lambda i: (i, 0)),
        ),
        compiler_params=pltpu.CompilerParams(
            # Batch axis is embarrassingly parallel -> megacore / v7x dual-TC sharding.
            dimension_semantics=("parallel",),
        ),
    )(cls_p, meta_p, w1c, w1m, b1p, w2r)

    return out[:B, :1]   # drop padded batch rows and the broadcast lanes


# ----------------------------- glue: synthetic encoder ----------------------------- #
def synthetic_encoder_cls(tokens, attention_mask, emb_table, w_enc, b_enc):
    """Deterministic stand-in for the injected `encoder` module.

    Only last_hidden_state[:, 0] is consumed by the head, so compute just the CLS
    position instead of the full [B, S, H] hidden state.
    """
    emb0 = emb_table[tokens[:, 0]]                               # [B, H]
    emb0 = emb0 * attention_mask[:, 0, None].astype(emb0.dtype)  # honor the mask at pos 0
    return jnp.tanh(emb0 @ w_enc + b_enc)                        # [B, H]


@jax.jit
def useful_score_regressor_all_feat(tokens, attention_mask, meta_feats, params):
    cls = synthetic_encoder_cls(
        tokens, attention_mask, params["emb_table"], params["w_enc"], params["b_enc"]
    )
    return regressor_head(
        cls, meta_feats, params["w1"], params["b1"], params["w2"], params["b2"]
    )


# ----------------------------- main ----------------------------- #
if __name__ == "__main__":
    B = 2            # batch
    S = 8            # sequence length
    H = 32           # encoder hidden size ("hidden_dim" arg)
    M = 8            # num_meta_feats
    D = H + M        # self.hidden_dim
    OUT = 1          # outputs
    VOCAB = 64

    key = jax.random.PRNGKey(0)
    k = jax.random.split(key, 10)

    tokens = jax.random.randint(k[0], (B, S), 0, VOCAB, dtype=jnp.int32)
    attention_mask = jnp.ones((B, S), dtype=jnp.int32).at[:, S // 2:].set(
        jax.random.randint(k[1], (B, S - S // 2), 0, 2, dtype=jnp.int32))
    meta_feats = jax.random.normal(k[2], (B, M), dtype=jnp.float32)

    params = {
        # synthetic encoder params (glue / injected dependency)
        "emb_table": 0.1 * jax.random.normal(k[3], (VOCAB, H), dtype=jnp.float32),
        "w_enc":     0.1 * jax.random.normal(k[4], (H, H), dtype=jnp.float32),
        "b_enc":     0.01 * jax.random.normal(k[5], (H,), dtype=jnp.float32),
        # head params — shapes from the module's __init__, stored as (in, out)
        "w1": 0.05 * jax.random.normal(k[6], (D, D), dtype=jnp.float32),
        "b1": 0.01 * jax.random.normal(k[7], (D,), dtype=jnp.float32),
        "w2": 0.05 * jax.random.normal(k[8], (D, OUT), dtype=jnp.float32),
        "b2": 0.01 * jax.random.normal(k[9], (OUT,), dtype=jnp.float32),
    }

    logits = useful_score_regressor_all_feat(tokens, attention_mask, meta_feats, params)
    jax.block_until_ready(logits)

    # Pure-JAX reference (original concat-based head) to sanity-check the Pallas kernel.
    cls_ref = synthetic_encoder_cls(tokens, attention_mask,
                                    params["emb_table"], params["w_enc"], params["b_enc"])
    x_ref = jnp.concatenate([cls_ref, meta_feats], axis=1)
    h_ref = x_ref @ params["w1"] + params["b1"]
    h_ref = jnp.where(h_ref > 0, h_ref, NEG_SLOPE * h_ref)
    ref = h_ref @ params["w2"] + params["b2"]

    assert logits.shape == (B, OUT)
    assert jnp.allclose(logits, ref, atol=1e-5, rtol=1e-4)

    print("KERNEL_OK")
</pallas_src>

<mosaic_0001>
module attributes {stable_mosaic.version = 11 : i64} {
  func.func @head_kernel(%arg0: i32, %arg1: memref<8x32xf32, #tpu.memory_space<vmem>>, %arg2: memref<8x8xf32, #tpu.memory_space<vmem>>, %arg3: memref<32x128xf32, #tpu.memory_space<vmem>>, %arg4: memref<8x128xf32, #tpu.memory_space<vmem>>, %arg5: memref<1x128xf32, #tpu.memory_space<vmem>>, %arg6: memref<1x128xf32, #tpu.memory_space<vmem>>, %arg7: memref<8x128xf32, #tpu.memory_space<vmem>>) attributes {dimension_semantics = [#tpu.dimension_semantics<parallel>], iteration_bounds = array<i64: 1>, scalar_prefetch = 0 : i64, scratch_operands = 0 : i64, tpu.core_type = #tpu.core_type<tc>, window_params = [{transform_indices = @transform_0, window_bounds = array<i64: 8, 32>}, {transform_indices = @transform_1, window_bounds = array<i64: 8, 8>}, {pipeline_mode = #tpu.pipeline_mode<synchronous>, transform_indices = @transform_2, window_bounds = array<i64: 32, 128>}, {pipeline_mode = #tpu.pipeline_mode<synchronous>, transform_indices = @transform_3, window_bounds = array<i64: 8, 128>}, {pipeline_mode = #tpu.pipeline_mode<synchronous>, transform_indices = @transform_4, window_bounds = array<i64: 1, 128>}, {pipeline_mode = #tpu.pipeline_mode<synchronous>, transform_indices = @transform_5, window_bounds = array<i64: 1, 128>}, {transform_indices = @transform_6, window_bounds = array<i64: 8, 128>}]} {
    %c0 = arith.constant 0 : index
    %c0_0 = arith.constant 0 : index
    %0 = vector.load %arg1[%c0, %c0_0] : memref<8x32xf32, #tpu.memory_space<vmem>>, vector<8x32xf32>
    %c0_1 = arith.constant 0 : index
    %c0_2 = arith.constant 0 : index
    %1 = vector.load %arg3[%c0_1, %c0_2] : memref<32x128xf32, #tpu.memory_space<vmem>>, vector<32x128xf32>
    %cst = arith.constant dense<0.000000e+00> : vector<8x128xf32>
    %2 = tpu.matmul %0, %1, %cst {dimension_numbers = #tpu.dot_dimension_numbers<[1], [0], [0], [1], [0, 0, 1, 1], [], []>} : vector<8x32xf32>, vector<32x128xf32>, vector<8x128xf32> -> vector<8x128xf32>
    %c0_3 = arith.constant 0 : index
    %c0_4 = arith.constant 0 : index
    %3 = vector.load %arg2[%c0_3, %c0_4] : memref<8x8xf32, #tpu.memory_space<vmem>>, vector<8x8xf32>
    %c0_5 = arith.constant 0 : index
    %c0_6 = arith.constant 0 : index
    %4 = vector.load %arg4[%c0_5, %c0_6] : memref<8x128xf32, #tpu.memory_space<vmem>>, vector<8x128xf32>
    %cst_7 = arith.constant dense<0.000000e+00> : vector<8x128xf32>
    %5 = tpu.matmul %3, %4, %cst_7 {dimension_numbers = #tpu.dot_dimension_numbers<[1], [0], [0], [1], [0, 0, 1, 1], [], []>} : vector<8x8xf32>, vector<8x128xf32>, vector<8x128xf32> -> vector<8x128xf32>
    %6 = arith.addf %2, %5 : vector<8x128xf32>
    %c0_8 = arith.constant 0 : index
    %c0_9 = arith.constant 0 : index
    %7 = vector.load %arg5[%c0_8, %c0_9] : memref<1x128xf32, #tpu.memory_space<vmem>>, vector<1x128xf32>
    %8 = vector.broadcast %7 : vector<1x128xf32> to vector<8x128xf32>
    %9 = arith.addf %6, %8 : vector<8x128xf32>
    %cst_10 = arith.constant 0.000000e+00 : f32
    %10 = vector.broadcast %cst_10 : f32 to vector<8x128xf32>
    %11 = arith.cmpf ogt, %9, %10 : vector<8x128xf32>
    %cst_11 = arith.constant 0.00999999977 : f32
    %12 = vector.broadcast %cst_11 : f32 to vector<8x128xf32>
    %13 = arith.mulf %12, %9 : vector<8x128xf32>
    %14 = arith.select %11, %9, %13 : vector<8x128xi1>, vector<8x128xf32>
    %c0_12 = arith.constant 0 : index
    %c0_13 = arith.constant 0 : index
    %15 = vector.load %arg6[%c0_12, %c0_13] : memref<1x128xf32, #tpu.memory_space<vmem>>, vector<1x128xf32>
    %16 = vector.broadcast %15 : vector<1x128xf32> to vector<8x128xf32>
    %17 = arith.mulf %14, %16 : vector<8x128xf32>
    %cst_14 = arith.constant dense<0.000000e+00> : vector<8xf32>
    %18 = vector.multi_reduction <add>, %17, %cst_14 [1] : vector<8x128xf32> to vector<8xf32>
    %19 = vector.shape_cast %18 : vector<8xf32> to vector<8x1xf32>
    %20 = vector.shape_cast %19 : vector<8x1xf32> to vector<8x1xf32>
    %21 = vector.broadcast %20 : vector<8x1xf32> to vector<8x128xf32>
    %c0_15 = arith.constant 0 : index
    %c0_16 = arith.constant 0 : index
    %22 = vector.load %arg7[%c0_15, %c0_16] : memref<8x128xf32, #tpu.memory_space<vmem>>, vector<8x128xf32>
    tpu.vector_store %arg7[%c0_15, %c0_16], %21 {strides = array<i32>} : memref<8x128xf32, #tpu.memory_space<vmem>>, vector<8x128xf32>,
    return
  }
  func.func @transform_0(%arg0: i32) -> (i32, i32) {
    %c0_i32 = arith.constant 0 : i32
    %c0_i32_0 = arith.constant 0 : i32
    return %arg0, %c0_i32 : i32, i32
  }
  func.func @transform_1(%arg0: i32) -> (i32, i32) {
    %c0_i32 = arith.constant 0 : i32
    %c0_i32_0 = arith.constant 0 : i32
    return %arg0, %c0_i32 : i32, i32
  }
  func.func @transform_2(%arg0: i32) -> (i32, i32) {
    %c0_i32 = arith.constant 0 : i32
    %c0_i32_0 = arith.constant 0 : i32
    %c0_i32_1 = arith.constant 0 : i32
    return %c0_i32, %c0_i32_0 : i32, i32
  }
  func.func @transform_3(%arg0: i32) -> (i32, i32) {
    %c0_i32 = arith.constant 0 : i32
    %c0_i32_0 = arith.constant 0 : i32
    %c0_i32_1 = arith.constant 0 : i32
    return %c0_i32, %c0_i32_0 : i32, i32
  }
  func.func @transform_4(%arg0: i32) -> (i32, i32) {
    %c0_i32 = arith.constant 0 : i32
    %c0_i32_0 = arith.constant 0 : i32
    %c0_i32_1 = arith.constant 0 : i32
    return %c0_i32, %c0_i32_0 : i32, i32
  }
  func.func @transform_5(%arg0: i32) -> (i32, i32) {
    %c0_i32 = arith.constant 0 : i32
    %c0_i32_0 = arith.constant 0 : i32
    %c0_i32_1 = arith.constant 0 : i32
    return %c0_i32, %c0_i32_0 : i32, i32
  }
  func.func @transform_6(%arg0: i32) -> (i32, i32) {
    %c0_i32 = arith.constant 0 : i32
    %c0_i32_0 = arith.constant 0 : i32
    return %arg0, %c0_i32 : i32, i32
  }
}

</mosaic_0001>

<llo_original>
// kernel: useful_score_regressor_all_feat.1
$region0: #{useful_score_regressor_all_feat.1}
  #allocation0 [shape = 'u32[]', space=smem, size = 0x4, offset = 0x4, fixed_abs, tag = 'smem constant byte address 0x4 - core index']
  #allocation1 [shape = 'u32[144,128]{1,0:T(1,128)}', space=vmem, size = 0x12000, scoped, tag = 'internal scratch']
  %s0 = inlined_call_operand.vmem [shape: f32[8,32], index: 0, kind: input, shape index: {}]
  %s1 = inlined_call_operand.vmem [shape: f32[8,8], index: 1, kind: input, shape index: {}]
  %s2 = inlined_call_operand.vmem [shape: f32[32,128], index: 2, kind: input, shape index: {}]
  %s3 = inlined_call_operand.vmem [shape: f32[8,128], index: 3, kind: input, shape index: {}]
  %s4 = inlined_call_operand.vmem [shape: f32[1,128], index: 4, kind: input, shape index: {}]
  %s5 = inlined_call_operand.vmem [shape: f32[1,128], index: 5, kind: input, shape index: {}]
  %s6 = inlined_call_operand.vmem [shape: f32[8,128], index: 6, kind: output, shape index: {}]
  %s7 = sld [smem:[#allocation0]]
  $region34: #{useful_score_regressor_all_feat.1} parent=0
    _
  %s9 = ssub.s32 1, %s7
  %s10 = scalar_select 0, %s9, %s7
  // Predicated region
  $region2: #{useful_score_regressor_all_feat.1} parent=0 // pred_check
    _
  $region3: #{useful_score_regressor_all_feat.1} parent=0 // pred_check_branch
    %12 = sbr.rel (0) target = $region5
  $region4: #{useful_score_regressor_all_feat.1} parent=0 // pred_region
    _
  $region5: #{useful_score_regressor_all_feat.1} parent=0 // pred_fallthru
    _
  // Predicated region
  $region6: #{useful_score_regressor_all_feat.1} parent=0 // pred_check
    _
  $region7: #{useful_score_regressor_all_feat.1} parent=0 // pred_check_branch
    %14 = sbr.rel (0) target = $region9
  $region8: #{useful_score_regressor_all_feat.1} parent=0 // pred_region
    _
  $region9: #{useful_score_regressor_all_feat.1} parent=0 // pred_fallthru
    _
  // Predicated region
  $region10: #{useful_score_regressor_all_feat.1} parent=0 // pred_check
    _
  $region11: #{useful_score_regressor_all_feat.1} parent=0 // pred_check_branch
    %16 = sbr.rel (0) target = $region13
  $region12: #{useful_score_regressor_all_feat.1} parent=0 // pred_region
    _
  $region13: #{useful_score_regressor_all_feat.1} parent=0 // pred_fallthru
    _
  // Predicated region
  $region14: #{useful_score_regressor_all_feat.1} parent=0 // pred_check
    _
  $region15: #{useful_score_regressor_all_feat.1} parent=0 // pred_check_branch
    %18 = sbr.rel (0) target = $region17
  $region16: #{useful_score_regressor_all_feat.1} parent=0 // pred_region
    _
  $region17: #{useful_score_regressor_all_feat.1} parent=0 // pred_fallthru
    _
  // Predicated region
  $region18: #{useful_score_regressor_all_feat.1} parent=0 // pred_check
    _
  $region19: #{useful_score_regressor_all_feat.1} parent=0 // pred_check_branch
    %20 = sbr.rel (0) target = $region21
  $region20: #{useful_score_regressor_all_feat.1} parent=0 // pred_region
    _
  $region21: #{useful_score_regressor_all_feat.1} parent=0 // pred_fallthru
    _
  // Predicated region
  $region22: #{useful_score_regressor_all_feat.1} parent=0 // pred_check
    _
  $region23: #{useful_score_regressor_all_feat.1} parent=0 // pred_check_branch
    %22 = sbr.rel (0) target = $region25
  $region24: #{useful_score_regressor_all_feat.1} parent=0 // pred_region
    _
  $region25: #{useful_score_regressor_all_feat.1} parent=0 // pred_fallthru
    _
  %v23 = vld [vmem:[%s0] sm:$0xff]
  %v24 = vld [vmem:[%s2] sm:$0xff]
  %v25 = vld [vmem:[%s2 + $0x8] sm:$0xff]
  %v26 = vld [vmem:[%s2 + $0x10] sm:$0xff]
  %v27 = vld [vmem:[%s2 + $0x18] sm:$0xff]
  %v28 = vld [vmem:[%s1] sm:$0xff]
  %v29 = vld [vmem:[%s3] sm:$0xff]
  %vm30 = vcmask 64512
  %v32 = vsel %vm30, %v28, 0
  %34 = vmatprep.subr.mxu0 0.0
  %35 = vmatpush1.msra.mxu0 %v29
  %36 = vmatprep.subr.mxu0 0.0
  %37 = vmatpush1.msra.mxu0 0.0
  %38 = vmatprep.subr.mxu0 0.0
  %39 = vmatpush1.msra.mxu0 0.0
  %40 = vmatprep.subr.mxu0 0.0
  %41 = vmatpush1.msra.mxu0 0.0
  %42 = vmatprep.subr.mxu0 0.0
  %43 = vmatpush1.msra.mxu0 0.0
  %44 = vmatprep.subr.mxu0 0.0
  %45 = vmatpush1.msra.mxu0 0.0
  %46 = vmatprep.subr.mxu0 0.0
  %47 = vmatpush1.msra.mxu0 0.0
  %48 = vmatprep.subr.mxu0 0.0
  %49 = vmatpush1.msra.mxu0 0.0
  %50 = vmatprep.subr.mxu0 0.0
  %51 = vmatpush1.msra.mxu0 0.0
  %52 = vmatprep.subr.mxu0 0.0
  %53 = vmatpush1.msra.mxu0 0.0
  %54 = vmatprep.subr.mxu0 0.0
  %55 = vmatpush1.msra.mxu0 0.0
  %56 = vmatprep.subr.mxu0 0.0
  %57 = vmatpush1.msra.mxu0 0.0
  %58 = vmatprep.subr.mxu0 0.0
  %59 = vmatpush1.msra.mxu0 0.0
  %60 = vmatprep.subr.mxu0 0.0
  %61 = vmatpush1.msra.mxu0 0.0
  %62 = vmatprep.subr.mxu0 0.0
  %63 = vmatpush1.msra.mxu0 0.0
  %64 = vmatprep.subr.mxu0 0.0
  %65 = vmatpush1.msra.mxu0 0.0
  %66 = vmatprep.subr.mxu0 0.0
  %67 = vmatpush1.msra.mxu0 0.0
  %68 = vmatprep.subr.mxu0 0.0
  %69 = vmatpush1.msra.mxu0 0.0
  %70 = vmatprep.subr.mxu0 0.0
  %71 = vmatpush1.msra.mxu0 0.0
  %72 = vmatprep.subr.mxu0 0.0
  %73 = vmatpush1.msra.mxu0 0.0
  %74 = vmatprep.subr.mxu0 0.0
  %75 = vmatpush1.msra.mxu0 0.0
  %76 = vmatprep.subr.mxu0 0.0
  %77 = vmatpush1.msra.mxu0 0.0
  %78 = vmatprep.subr.mxu0 0.0
  %79 = vmatpush1.msra.mxu0 0.0
  %80 = vmatprep.subr.mxu0 0.0
  %81 = vmatpush1.msra.mxu0 0.0
  %82 = vmatprep.subr.mxu0 0.0
  %83 = vmatpush1.msra.mxu0 0.0
  %84 = vmatprep.subr.mxu0 0.0
  %85 = vmatpush1.msra.mxu0 0.0
  %86 = vmatprep.subr.mxu0 0.0
  %87 = vmatpush1.msra.mxu0 0.0
  %88 = vmatprep.subr.mxu0 0.0
  %89 = vmatpush1.msra.mxu0 0.0
  %90 = vmatprep.subr.mxu0 0.0
  %91 = vmatpush1.msra.mxu0 0.0
  %92 = vmatprep.subr.mxu0 0.0
  %93 = vmatpush1.msra.mxu0 0.0
  %94 = vmatprep.subr.mxu0 0.0
  %95 = vmatpush1.msra.mxu0 0.0
  %96 = vmatprep.subr.mxu0 0.0
  %97 = vmatpush1.msra.mxu0 0.0
  %98 = vmatprep.mubr.f32.mxu0 0.0
  %99 = vmatmul.mubr.f32.gmra.mrb[0].mxu0 %v32
  %v100 = vpop.f32.mrb[0].mxu0
  %v101 = vadd.f32 0.0, %v100
  %v102 = vpop.f32.mrb[0].mxu0
  %103 = vdwg.mxu0
  %vm104 = vcmask 261120
  %v106 = vsel %vm104, %v23, 0
  %108 = vmatprep.subr.mxu0 0.0
  %109 = vmatpush1.msra.mxu0 %v24
  %110 = vmatprep.subr.mxu0 0.0
  %111 = vmatpush1.msra.mxu0 %v25
  %112 = vmatprep.subr.mxu0 0.0
  %113 = vmatpush1.msra.mxu0 %v26
  %114 = vmatprep.subr.mxu0 0.0
  %115 = vmatpush1.msra.mxu0 %v27
  %116 = vmatprep.subr.mxu0 0.0
  %117 = vmatpush1.msra.mxu0 0.0
  %118 = vmatprep.subr.mxu0 0.0
  %119 = vmatpush1.msra.mxu0 0.0
  %120 = vmatprep.subr.mxu0 0.0
  %121 = vmatpush1.msra.mxu0 0.0
  %122 = vmatprep.subr.mxu0 0.0
  %123 = vmatpush1.msra.mxu0 0.0
  %124 = vmatprep.subr.mxu0 0.0
  %125 = vmatpush1.msra.mxu0 0.0
  %126 = vmatprep.subr.mxu0 0.0
  %127 = vmatpush1.msra.mxu0 0.0
  %128 = vmatprep.subr.mxu0 0.0
  %129 = vmatpush1.msra.mxu0 0.0
  %130 = vmatprep.subr.mxu0 0.0
  %131 = vmatpush1.msra.mxu0 0.0
  %132 = vmatprep.subr.mxu0 0.0
  %133 = vmatpush1.msra.mxu0 0.0
  %134 = vmatprep.subr.mxu0 0.0
  %135 = vmatpush1.msra.mxu0 0.0
  %136 = vmatprep.subr.mxu0 0.0
  %137 = vmatpush1.msra.mxu0 0.0
  %138 = vmatprep.subr.mxu0 0.0
  %139 = vmatpush1.msra.mxu0 0.0
  %140 = vmatprep.subr.mxu0 0.0
  %141 = vmatpush1.msra.mxu0 0.0
  %142 = vmatprep.subr.mxu0 0.0
  %143 = vmatpush1.msra.mxu0 0.0
  %144 = vmatprep.subr.mxu0 0.0
  %145 = vmatpush1.msra.mxu0 0.0
  %146 = vmatprep.subr.mxu0 0.0
  %147 = vmatpush1.msra.mxu0 0.0
  %148 = vmatprep.subr.mxu0 0.0
  %149 = vmatpush1.msra.mxu0 0.0
  %150 = vmatprep.subr.mxu0 0.0
  %151 = vmatpush1.msra.mxu0 0.0
  %152 = vmatprep.subr.mxu0 0.0
  %153 = vmatpush1.msra.mxu0 0.0
  %154 = vmatprep.subr.mxu0 0.0
  %155 = vmatpush1.msra.mxu0 0.0
  %156 = vmatprep.subr.mxu0 0.0
  %157 = vmatpush1.msra.mxu0 0.0
  %158 = vmatprep.subr.mxu0 0.0
  %159 = vmatpush1.msra.mxu0 0.0
  %160 = vmatprep.subr.mxu0 0.0
  %161 = vmatpush1.msra.mxu0 0.0
  %162 = vmatprep.subr.mxu0 0.0
  %163 = vmatpush1.msra.mxu0 0.0
  %164 = vmatprep.subr.mxu0 0.0
  %165 = vmatpush1.msra.mxu0 0.0
  %166 = vmatprep.subr.mxu0 0.0
  %167 = vmatpush1.msra.mxu0 0.0
  %168 = vmatprep.subr.mxu0 0.0
  %169 = vmatpush1.msra.mxu0 0.0
  %170 = vmatprep.subr.mxu0 0.0
  %171 = vmatpush1.msra.mxu0 0.0
  %172 = vmatprep.mubr.f32.mxu0 0.0
  %173 = vmatmul.mubr.f32.gmra.mrb[0].mxu0 %v106
  %v174 = vpop.f32.mrb[0].mxu0
  %v175 = vadd.f32 %v101, %v174
  %v176 = vpop.f32.mrb[0].mxu0
  %177 = vdwg.mxu0
  %v178 = vld [vmem:[%s4] sm:$0x1]
  %v180 = vlaneseq
  %v181 = vshrl.u32 %v180, 7
  %v182 = vsub.s32 0, %v181
  %v183 = vrot.slane %v178, %v182
  %v185 = vadd.f32 %v175, %v183
  %vm186 = vcmp.gt.f32.partialorder %v185, 0.0
  %v187 = vmul.f32 %v185, 0.01
  %v188 = vsel %vm186, %v185, %v187
  %v189 = vld [vmem:[%s5] sm:$0x1]
  %v191 = vlaneseq
  %v192 = vshrl.u32 %v191, 7
  %v193 = vsub.s32 0, %v192
  %v194 = vrot.slane %v189, %v193
  %v196 = vmul.f32 %v188, %v194
  %197 = vadd.xlane.f32.xlu0 %v196
  %v198 = vpop.xlane.xlu0 %197
  %199 = vst [vmem:[%s6] sm:$0xff] %v198
  // Predicated region
  $region26: #{useful_score_regressor_all_feat.1} parent=0 // pred_check
    _
  $region27: #{useful_score_regressor_all_feat.1} parent=0 // pred_check_branch
    %201 = sbr.rel (0) target = $region29
  $region28: #{useful_score_regressor_all_feat.1} parent=0 // pred_region
    _
  $region29: #{useful_score_regressor_all_feat.1} parent=0 // pred_fallthru
    _
  // Predicated region
  $region30: #{useful_score_regressor_all_feat.1} parent=0 // pred_check
    _
  $region31: #{useful_score_regressor_all_feat.1} parent=0 // pred_check_branch
    %203 = sbr.rel (0) target = $region33
  $region32: #{useful_score_regressor_all_feat.1} parent=0 // pred_region
    _
  $region33: #{useful_score_regressor_all_feat.1} parent=0 // pred_fallthru
    _

</llo_original>
